<compile_context>
chip_gen: v7x
topology: tpu7x:2x2x1
jax: 0.10.0
libtpu: 0.0.40
codegen_flags: <defaults>
</compile_context>

<pallas_src>
import jax
import jax.numpy as jnp
import numpy as np
from jax.experimental import pallas as pl
from jax.experimental.pallas import tpu as pltpu

# ---------------- problem constants (from the PyTorch snippet) ----------------
N = 4                 # number of nodes
IN_CHANNELS = 1
HIDDEN = 16
OUT_CHANNELS = 2

# padded sizes for TPU tiling
N_PAD = 8             # nodes -> sublane multiple
OUT_PAD = 128         # output channels -> lane-dense (unmasked stores)

SLAB_A_ROWS = 4 * N_PAD          # A_pad | x^T bcast | W1 bcast | b1 bcast
SLAB_B_ROWS = HIDDEN + N_PAD     # W2 | b2 bcast


# ------------------------------- Pallas kernel --------------------------------
def gcn_kernel(ab_ref, wb_ref, o_ref):
    """Fused 2-layer GCN forward (single invocation, everything in VMEM).

    ab_ref : (32, 16)   rows  0.. 7: A_nrm zero-padded (real data in lanes 0..7)
                        rows  8..15: x^T broadcast along sublanes
                        rows 16..23: W1[0, :] broadcast along sublanes
                        rows 24..31: b1 broadcast along sublanes
    wb_ref : (24, 128)  rows  0..15: W2 zero-padded along output lanes
                        rows 16..23: b2 broadcast (zero-padded lanes)
    o_ref  : (8, 128)   lane-dense output block
    """
    a16 = ab_ref[0:8, :]        # (8, 16)  adjacency, lanes 8..15 are zero
    xtb = ab_ref[8:16, :]       # (8, 16)  x^T broadcast
    w1b = ab_ref[16:24, :]      # (8, 16)  W1 row broadcast
    b1b = ab_ref[24:32, :]      # (8, 16)  b1 broadcast

    # ---- layer 1: h = relu((A @ x) * W1 + b1) ----
    # IN_CHANNELS == 1, so x @ W1 is a rank-1 outer product and
    # A @ (x W1) == (A x) W1.  A@x is a (8,1) matvec done on VPU + XLU
    # (elementwise mul + lane reduce); no MXU op needed for layer 1.
    ax = jnp.sum(a16 * xtb, axis=-1, keepdims=True)           # (8, 1)
    h = jnp.maximum(ax * w1b + b1b, 0.0)                      # (8, 16)

    # ---- layer 2 (reassociated): (A @ h) @ W2 + b2 ----
    a8 = a16[:, 0:8]                                           # (8, 8)
    m = jnp.dot(a8, h, preferred_element_type=jnp.float32)     # (8, 16)
    o = jnp.dot(m, wb_ref[0:HIDDEN, :],
                preferred_element_type=jnp.float32)            # (8, 128)
    o_ref[...] = o + wb_ref[HIDDEN:SLAB_B_ROWS, :]


def gcn_forward(slab_a, slab_b):
    vmem = pl.BlockSpec(memory_space=pltpu.MemorySpace.VMEM)
    cost = pl.CostEstimate(
        flops=(2 * N_PAD * HIDDEN                       # A@x mul+reduce
               + 3 * N_PAD * HIDDEN                     # outer product + bias + relu
               + 2 * N_PAD * N_PAD * HIDDEN             # A @ h
               + 2 * N_PAD * HIDDEN * OUT_PAD           # m @ W2
               + N_PAD * OUT_PAD),                      # + b2
        transcendentals=0,
        bytes_accessed=4 * (SLAB_A_ROWS * HIDDEN
                            + SLAB_B_ROWS * OUT_PAD
                            + N_PAD * OUT_PAD),
    )
    return pl.pallas_call(
        gcn_kernel,
        out_shape=jax.ShapeDtypeStruct((N_PAD, OUT_PAD), jnp.float32),
        in_specs=[vmem, vmem],
        out_specs=vmem,
        cost_estimate=cost,
    )(slab_a, slab_b)


# ------------------------------- JAX glue --------------------------------------
def build_normalized_adjacency(edge_index, num_nodes):
    src, dst = edge_index[0], edge_index[1]
    a = jnp.zeros((num_nodes, num_nodes), jnp.float32).at[dst, src].add(1.0)
    a_hat = a + jnp.eye(num_nodes, dtype=jnp.float32)
    deg = a_hat.sum(axis=1)
    d_inv_sqrt = jnp.where(deg > 0, 1.0 / jnp.sqrt(deg), 0.0)
    return d_inv_sqrt[:, None] * a_hat * d_inv_sqrt[None, :]


def pad_to(x, shape):
    out = jnp.zeros(shape, x.dtype)
    return out.at[tuple(slice(0, s) for s in x.shape)].set(x)


def glorot(key, fan_in, fan_out):
    limit = jnp.sqrt(6.0 / (fan_in + fan_out))
    return jax.random.uniform(key, (fan_in, fan_out), jnp.float32, -limit, limit)


def pack_inputs(a_nrm, x, w1, b1, w2, b2):
    """Pack the six small operands into two sublane-stacked VMEM slabs."""
    # slab_a: (32, 16)
    slab_a = jnp.zeros((SLAB_A_ROWS, HIDDEN), jnp.float32)
    slab_a = slab_a.at[0:N_PAD, 0:N_PAD].set(pad_to(a_nrm, (N_PAD, N_PAD)))
    x_row = pad_to(x[:, 0][None, :], (1, HIDDEN))                 # x^T, lanes 0..3
    slab_a = slab_a.at[N_PAD:2 * N_PAD, :].set(
        jnp.broadcast_to(x_row, (N_PAD, HIDDEN)))
    slab_a = slab_a.at[2 * N_PAD:3 * N_PAD, :].set(
        jnp.broadcast_to(w1, (N_PAD, HIDDEN)))                    # w1 is (1, 16)
    slab_a = slab_a.at[3 * N_PAD:4 * N_PAD, :].set(
        jnp.broadcast_to(b1[None, :], (N_PAD, HIDDEN)))

    # slab_b: (24, 128)
    slab_b = jnp.zeros((SLAB_B_ROWS, OUT_PAD), jnp.float32)
    slab_b = slab_b.at[0:HIDDEN, 0:OUT_CHANNELS].set(w2)
    slab_b = slab_b.at[HIDDEN:SLAB_B_ROWS, 0:OUT_CHANNELS].set(
        jnp.broadcast_to(b2[None, :], (N_PAD, OUT_CHANNELS)))
    return slab_a, slab_b


if __name__ == "__main__":
    # inputs from the PyTorch snippet (deterministic)
    edge_index = jnp.array([[0, 1, 1, 2, 2, 3],
                            [1, 0, 2, 1, 3, 2]], dtype=jnp.int32)
    x = jnp.array([[1.0], [1.0], [0.0], [0.0]], dtype=jnp.float32)   # (4, 1)

    # deterministic parameter init (glorot weights, zero biases, like GCNConv)
    key = jax.random.PRNGKey(0)
    k1, k2 = jax.random.split(key)
    w1 = glorot(k1, IN_CHANNELS, HIDDEN)        # (1, 16)
    b1 = jnp.zeros((HIDDEN,), jnp.float32)
    w2 = glorot(k2, HIDDEN, OUT_CHANNELS)       # (16, 2)
    b2 = jnp.zeros((OUT_CHANNELS,), jnp.float32)

    a_nrm = build_normalized_adjacency(edge_index, N)               # (4, 4)

    slab_a, slab_b = pack_inputs(a_nrm, x, w1, b1, w2, b2)

    # padding invariant the kernel relies on (see header comment)
    assert np.allclose(np.asarray(slab_a[0:N_PAD, N:])[..., :], 0.0)
    assert np.allclose(np.asarray(slab_a[N:N_PAD, 0:HIDDEN]), 0.0)

    out_pad = gcn_forward(slab_a, slab_b)
    out_pad = jax.block_until_ready(out_pad)
    out = out_pad[:N, :OUT_CHANNELS]                                # (4, 2)

    # reference in plain JAX for sanity
    h_ref = jnp.maximum(a_nrm @ (x @ w1) + b1, 0.0)
    out_ref = a_nrm @ (h_ref @ w2) + b2
    np.testing.assert_allclose(np.asarray(out), np.asarray(out_ref),
                               rtol=1e-5, atol=1e-5)

    print("KERNEL_OK")
</pallas_src>

<mosaic_0001>
module attributes {stable_mosaic.version = 11 : i64} {
  func.func @gcn_kernel(%arg0: memref<32x16xf32, #tpu.memory_space<vmem>>, %arg1: memref<24x128xf32, #tpu.memory_space<vmem>>, %arg2: memref<8x128xf32, #tpu.memory_space<vmem>>) attributes {dimension_semantics = [], scalar_prefetch = 0 : i64, scratch_operands = 0 : i64, tpu.core_type = #tpu.core_type<tc>} {
    %c0 = arith.constant 0 : index
    %c0_0 = arith.constant 0 : index
    %0 = vector.load %arg0[%c0, %c0_0] : memref<32x16xf32, #tpu.memory_space<vmem>>, vector<8x16xf32>
    %c8 = arith.constant 8 : index
    %c0_1 = arith.constant 0 : index
    %1 = vector.load %arg0[%c8, %c0_1] : memref<32x16xf32, #tpu.memory_space<vmem>>, vector<8x16xf32>
    %c16 = arith.constant 16 : index
    %c0_2 = arith.constant 0 : index
    %2 = vector.load %arg0[%c16, %c0_2] : memref<32x16xf32, #tpu.memory_space<vmem>>, vector<8x16xf32>
    %c24 = arith.constant 24 : index
    %c0_3 = arith.constant 0 : index
    %3 = vector.load %arg0[%c24, %c0_3] : memref<32x16xf32, #tpu.memory_space<vmem>>, vector<8x16xf32>
    %4 = arith.mulf %0, %1 : vector<8x16xf32>
    %cst = arith.constant dense<0.000000e+00> : vector<8xf32>
    %5 = vector.multi_reduction <add>, %4, %cst [1] : vector<8x16xf32> to vector<8xf32>
    %6 = vector.shape_cast %5 : vector<8xf32> to vector<8x1xf32>
    %7 = vector.broadcast %6 : vector<8x1xf32> to vector<8x16xf32>
    %8 = arith.mulf %7, %2 : vector<8x16xf32>
    %9 = arith.addf %8, %3 : vector<8x16xf32>
    %cst_4 = arith.constant 0.000000e+00 : f32
    %10 = vector.broadcast %cst_4 : f32 to vector<8x16xf32>
    %11 = arith.maximumf %9, %10 : vector<8x16xf32>
    %12 = vector.extract_strided_slice %0 {offsets = [0, 0], sizes = [8, 8], strides = [1, 1]} : vector<8x16xf32> to vector<8x8xf32>
    %cst_5 = arith.constant dense<0.000000e+00> : vector<8x16xf32>
    %13 = tpu.matmul %12, %11, %cst_5 {dimension_numbers = #tpu.dot_dimension_numbers<[1], [0], [0], [1], [0, 0, 1, 1], [], []>} : vector<8x8xf32>, vector<8x16xf32>, vector<8x16xf32> -> vector<8x16xf32>
    %c0_6 = arith.constant 0 : index
    %c0_7 = arith.constant 0 : index
    %14 = vector.load %arg1[%c0_6, %c0_7] : memref<24x128xf32, #tpu.memory_space<vmem>>, vector<16x128xf32>
    %cst_8 = arith.constant dense<0.000000e+00> : vector<8x128xf32>
    %15 = tpu.matmul %13, %14, %cst_8 {dimension_numbers = #tpu.dot_dimension_numbers<[1], [0], [0], [1], [0, 0, 1, 1], [], []>} : vector<8x16xf32>, vector<16x128xf32>, vector<8x128xf32> -> vector<8x128xf32>
    %c16_9 = arith.constant 16 : index
    %c0_10 = arith.constant 0 : index
    %16 = vector.load %arg1[%c16_9, %c0_10] : memref<24x128xf32, #tpu.memory_space<vmem>>, vector<8x128xf32>
    %17 = arith.addf %15, %16 : vector<8x128xf32>
    %c0_11 = arith.constant 0 : index
    %c0_12 = arith.constant 0 : index
    %18 = vector.load %arg2[%c0_11, %c0_12] : memref<8x128xf32, #tpu.memory_space<vmem>>, vector<8x128xf32>
    tpu.vector_store %arg2[%c0_11, %c0_12], %17 {strides = array<i32>} : memref<8x128xf32, #tpu.memory_space<vmem>>, vector<8x128xf32>,
    return
  }
}

</mosaic_0001>

<llo_original>
// kernel: tpu_custom_call.1
$region0: #{tpu_custom_call.1}
  #allocation0 [shape = 'u32[]', space=smem, size = 0x4, offset = 0x4, fixed_abs, tag = 'smem constant byte address 0x4 - core index']
  #allocation1 [shape = 'u32[144,128]{1,0:T(1,128)}', space=vmem, size = 0x12000, scoped, tag = 'internal scratch']
  %s0 = inlined_call_operand.vmem [shape: f32[32,16], index: 0, kind: input, shape index: {}]
  %s1 = inlined_call_operand.vmem [shape: f32[24,128], index: 1, kind: input, shape index: {}]
  %s2 = inlined_call_operand.hbm [shape: f32[8,128], index: 2, kind: output, shape index: {}]
  %s3 = sld [smem:[#allocation0]]
  $region18: #{tpu_custom_call.1} parent=0
    _
  %s5 = ssub.s32 1, %s3
  %s6 = scalar_select 0, %s5, %s3
  $region1: #{tpu_custom_call.1} parent=0
    #allocation2 [shape = 'u8[4096]{0}', space=vmem, size = 0x1000, scoped, tag = 'output window, operand 0, single buffered']
    #allocation3 [shape = 's32[1]{0}', space=sflag, size = 0x4, scoped, tag = 'scoped memory for tpu_custom_call.1']
    %7 = vsyncpa [#allocation3], 0
    // Predicated region
    $region2: #{tpu_custom_call.1} parent=1 // pred_check
      _
    $region3: #{tpu_custom_call.1} parent=1 // pred_check_branch
      %9 = sbr.rel (0) target = $region5
    $region4: #{tpu_custom_call.1} parent=1 // pred_region
      _
    $region5: #{tpu_custom_call.1} parent=1 // pred_fallthru
      _
    // Predicated region
    $region6: #{tpu_custom_call.1} parent=1 // pred_check
      _
    $region7: #{tpu_custom_call.1} parent=1 // pred_check_branch
      %11 = sbr.rel (0) target = $region9
    $region8: #{tpu_custom_call.1} parent=1 // pred_region
      _
    $region9: #{tpu_custom_call.1} parent=1 // pred_fallthru
      _
    %v12 = vld [vmem:[%s0] sm:$0xff]
    %v13 = vld [vmem:[%s0 + $0x8] sm:$0xff]
    %v14 = vld [vmem:[%s0 + $0x10] sm:$0xff]
    %v15 = vld [vmem:[%s0 + $0x18] sm:$0xff]
    %v16 = vmul.f32 %v12, %v13
    %vm17 = vcmask 130048
    %v18 = vsel %vm17, %v16, 0.0
    %19 = vadd.xlane.f32.xlu0 %v18
    %v20 = vpop.xlane.xlu0 %19
    %v21 = vmul.f32 %v20, %v14
    %v22 = vadd.f32 %v21, %v15
    %v23 = vmax.f32 %v22, 0.0
    %vm24 = vcmask 64512
    %v26 = vsel %vm24, %v12, 0
    %28 = vmatprep.subr.mxu0 0.0
    %29 = vmatpush1.msra.mxu0 %v23
    %30 = vmatprep.subr.mxu0 0.0
    %31 = vmatpush1.msra.mxu0 0.0
    %32 = vmatprep.subr.mxu0 0.0
    %33 = vmatpush1.msra.mxu0 0.0
    %34 = vmatprep.subr.mxu0 0.0
    %35 = vmatpush1.msra.mxu0 0.0
    %36 = vmatprep.subr.mxu0 0.0
    %37 = vmatpush1.msra.mxu0 0.0
    %38 = vmatprep.subr.mxu0 0.0
    %39 = vmatpush1.msra.mxu0 0.0
    %40 = vmatprep.subr.mxu0 0.0
    %41 = vmatpush1.msra.mxu0 0.0
    %42 = vmatprep.subr.mxu0 0.0
    %43 = vmatpush1.msra.mxu0 0.0
    %44 = vmatprep.subr.mxu0 0.0
    %45 = vmatpush1.msra.mxu0 0.0
    %46 = vmatprep.subr.mxu0 0.0
    %47 = vmatpush1.msra.mxu0 0.0
    %48 = vmatprep.subr.mxu0 0.0
    %49 = vmatpush1.msra.mxu0 0.0
    %50 = vmatprep.subr.mxu0 0.0
    %51 = vmatpush1.msra.mxu0 0.0
    %52 = vmatprep.subr.mxu0 0.0
    %53 = vmatpush1.msra.mxu0 0.0
    %54 = vmatprep.subr.mxu0 0.0
    %55 = vmatpush1.msra.mxu0 0.0
    %56 = vmatprep.subr.mxu0 0.0
    %57 = vmatpush1.msra.mxu0 0.0
    %58 = vmatprep.subr.mxu0 0.0
    %59 = vmatpush1.msra.mxu0 0.0
    %60 = vmatprep.subr.mxu0 0.0
    %61 = vmatpush1.msra.mxu0 0.0
    %62 = vmatprep.subr.mxu0 0.0
    %63 = vmatpush1.msra.mxu0 0.0
    %64 = vmatprep.subr.mxu0 0.0
    %65 = vmatpush1.msra.mxu0 0.0
    %66 = vmatprep.subr.mxu0 0.0
    %67 = vmatpush1.msra.mxu0 0.0
    %68 = vmatprep.subr.mxu0 0.0
    %69 = vmatpush1.msra.mxu0 0.0
    %70 = vmatprep.subr.mxu0 0.0
    %71 = vmatpush1.msra.mxu0 0.0
    %72 = vmatprep.subr.mxu0 0.0
    %73 = vmatpush1.msra.mxu0 0.0
    %74 = vmatprep.subr.mxu0 0.0
    %75 = vmatpush1.msra.mxu0 0.0
    %76 = vmatprep.subr.mxu0 0.0
    %77 = vmatpush1.msra.mxu0 0.0
    %78 = vmatprep.subr.mxu0 0.0
    %79 = vmatpush1.msra.mxu0 0.0
    %80 = vmatprep.subr.mxu0 0.0
    %81 = vmatpush1.msra.mxu0 0.0
    %82 = vmatprep.subr.mxu0 0.0
    %83 = vmatpush1.msra.mxu0 0.0
    %84 = vmatprep.subr.mxu0 0.0
    %85 = vmatpush1.msra.mxu0 0.0
    %86 = vmatprep.subr.mxu0 0.0
    %87 = vmatpush1.msra.mxu0 0.0
    %88 = vmatprep.subr.mxu0 0.0
    %89 = vmatpush1.msra.mxu0 0.0
    %90 = vmatprep.subr.mxu0 0.0
    %91 = vmatpush1.msra.mxu0 0.0
    %92 = vmatprep.mubr.f32.mxu0 0.0
    %93 = vmatmul.mubr.f32.gmra.mrb[0].mxu0 %v26
    %v94 = vpop.f32.mrb[0].mxu0
    %v95 = vadd.f32 0.0, %v94
    %v96 = vpop.f32.mrb[0].mxu0
    %97 = vdwg.mxu0
    %v98 = vld [vmem:[%s1] sm:$0xff]
    %v99 = vld [vmem:[%s1 + $0x8] sm:$0xff]
    %v100 = vld [vmem:[%s1 + $0x10] sm:$0xff]
    %v102 = vsel %vm17, %v95, 0
    %104 = vmatprep.subr.mxu0 0.0
    %105 = vmatpush1.msra.mxu0 %v98
    %106 = vmatprep.subr.mxu0 0.0
    %107 = vmatpush1.msra.mxu0 %v99
    %108 = vmatprep.subr.mxu0 0.0
    %109 = vmatpush1.msra.mxu0 0.0
    %110 = vmatprep.subr.mxu0 0.0
    %111 = vmatpush1.msra.mxu0 0.0
    %112 = vmatprep.subr.mxu0 0.0
    %113 = vmatpush1.msra.mxu0 0.0
    %114 = vmatprep.subr.mxu0 0.0
    %115 = vmatpush1.msra.mxu0 0.0
    %116 = vmatprep.subr.mxu0 0.0
    %117 = vmatpush1.msra.mxu0 0.0
    %118 = vmatprep.subr.mxu0 0.0
    %119 = vmatpush1.msra.mxu0 0.0
    %120 = vmatprep.subr.mxu0 0.0
    %121 = vmatpush1.msra.mxu0 0.0
    %122 = vmatprep.subr.mxu0 0.0
    %123 = vmatpush1.msra.mxu0 0.0
    %124 = vmatprep.subr.mxu0 0.0
    %125 = vmatpush1.msra.mxu0 0.0
    %126 = vmatprep.subr.mxu0 0.0
    %127 = vmatpush1.msra.mxu0 0.0
    %128 = vmatprep.subr.mxu0 0.0
    %129 = vmatpush1.msra.mxu0 0.0
    %130 = vmatprep.subr.mxu0 0.0
    %131 = vmatpush1.msra.mxu0 0.0
    %132 = vmatprep.subr.mxu0 0.0
    %133 = vmatpush1.msra.mxu0 0.0
    %134 = vmatprep.subr.mxu0 0.0
    %135 = vmatpush1.msra.mxu0 0.0
    %136 = vmatprep.subr.mxu0 0.0
    %137 = vmatpush1.msra.mxu0 0.0
    %138 = vmatprep.subr.mxu0 0.0
    %139 = vmatpush1.msra.mxu0 0.0
    %140 = vmatprep.subr.mxu0 0.0
    %141 = vmatpush1.msra.mxu0 0.0
    %142 = vmatprep.subr.mxu0 0.0
    %143 = vmatpush1.msra.mxu0 0.0
    %144 = vmatprep.subr.mxu0 0.0
    %145 = vmatpush1.msra.mxu0 0.0
    %146 = vmatprep.subr.mxu0 0.0
    %147 = vmatpush1.msra.mxu0 0.0
    %148 = vmatprep.subr.mxu0 0.0
    %149 = vmatpush1.msra.mxu0 0.0
    %150 = vmatprep.subr.mxu0 0.0
    %151 = vmatpush1.msra.mxu0 0.0
    %152 = vmatprep.subr.mxu0 0.0
    %153 = vmatpush1.msra.mxu0 0.0
    %154 = vmatprep.subr.mxu0 0.0
    %155 = vmatpush1.msra.mxu0 0.0
    %156 = vmatprep.subr.mxu0 0.0
    %157 = vmatpush1.msra.mxu0 0.0
    %158 = vmatprep.subr.mxu0 0.0
    %159 = vmatpush1.msra.mxu0 0.0
    %160 = vmatprep.subr.mxu0 0.0
    %161 = vmatpush1.msra.mxu0 0.0
    %162 = vmatprep.subr.mxu0 0.0
    %163 = vmatpush1.msra.mxu0 0.0
    %164 = vmatprep.subr.mxu0 0.0
    %165 = vmatpush1.msra.mxu0 0.0
    %166 = vmatprep.subr.mxu0 0.0
    %167 = vmatpush1.msra.mxu0 0.0
    %168 = vmatprep.mubr.f32.mxu0 0.0
    %169 = vmatmul.mubr.f32.gmra.mrb[0].mxu0 %v102
    %v170 = vpop.f32.mrb[0].mxu0
    %v171 = vadd.f32 %v100, %v170
    %v172 = vpop.f32.mrb[0].mxu0
    %173 = vdwg.mxu0
    %174 = vst [vmem:[#allocation2] sm:$0xff] %v171
    // Predicated region
    $region10: #{tpu_custom_call.1} parent=1 // pred_check
      _
    $region11: #{tpu_custom_call.1} parent=1 // pred_check_branch
      %176 = sbr.rel (0) target = $region13
    $region12: #{tpu_custom_call.1} parent=1 // pred_region
      %s178 = ssub.s32 128, 128
      %179 = vsyncadd [#allocation3], %s178
      %s181 = sshll.u32 [#allocation2], 4
      %s182 = int_to_ptr.vmem [resolvable:$true] %s181
      %184 = dma.vmem_to_hbm [thread:$0]  %s182, 128, %s2, [#allocation3]
    $region13: #{tpu_custom_call.1} parent=1 // pred_fallthru
      _
    // Predicated region
    $region14: #{tpu_custom_call.1} parent=1 // pred_check
      _
    $region15: #{tpu_custom_call.1} parent=1 // pred_check_branch
      %186 = sbr.rel (0) target = $region17
    $region16: #{tpu_custom_call.1} parent=1 // pred_region
      %187 = dma.done [#allocation3], 128
    $region17: #{tpu_custom_call.1} parent=1 // pred_fallthru
      _
    %188 = vsyncpa [#allocation3], 1

</llo_original>
